<compile_context>
chip_gen: v5e
topology: v5e:2x2
jax: 0.10.0
libtpu: 0.0.40
codegen_flags: <defaults>
</compile_context>

<pallas_src>
import functools
import math

import jax
import jax.numpy as jnp
from jax.experimental import pallas as pl
from jax.experimental.pallas import tpu as pltpu

_HID = 16                 # hidden width of fc1/fc2; fc3's 2 outputs use rows 0..1
_OUT_ROWS = 8             # output slab rows (sublane aligned); rows 0..2 are used
_HALF_LOG_2PI = 0.5 * math.log(2.0 * math.pi)   # Python float -> inlined, not captured


def _round_up(x, m):
    return -(-x // m) * m


def _k1(state_dim):
    """Contraction dim of the first layer, padded to the 8-sublane grain."""
    return _round_up(state_dim, 8)


# -----------------------------------------------------------------------------
# One-time parameter packing (call when weights change, NOT per forward).
#
# Packed for the transposed formulation  h_t = W @ x_t + b_col :
#   slab (64, LW) f32, LW = max(16, round_up(state_dim, 8))
#     rows  0..15 : fc1.weight (16, S) in lanes 0..S-1          (rest zero)
#     rows 16..31 : fc2.weight (16, 16)
#     rows 32..47 : fc3.weight (2, 16) in rows 32..33           (rest zero)
#     rows 48..63 : bias columns: lane0 = fc1.bias, lane1 = fc2.bias,
#                   lane2[0:2] = fc3.bias                       (rest zero)
# -----------------------------------------------------------------------------
def pack_actor_params(params):
    w1, b1, w2, b2, w3, b3 = params
    s = w1.shape[1]
    lw = max(_HID, _k1(s))
    slab = jnp.zeros((64, lw), jnp.float32)
    slab = slab.at[0:_HID, 0:s].set(w1.astype(jnp.float32))
    slab = slab.at[16:32, 0:_HID].set(w2.astype(jnp.float32))
    slab = slab.at[32:34, 0:_HID].set(w3.astype(jnp.float32))
    slab = slab.at[48:64, 0].set(b1.astype(jnp.float32))
    slab = slab.at[48:64, 1].set(b2.astype(jnp.float32))
    slab = slab.at[48:50, 2].set(b3.astype(jnp.float32))
    return slab


def make_actor_kernel(state_dim):
    k1 = _k1(state_dim)
    half_log_2pi = _HALF_LOG_2PI          # Python float constant

    def kernel(xt_ref, eps_ref, params_ref, out_ref):
        # ---- MLP, transposed: activations are (feature, batch_tile) ---------
        xt = xt_ref[...]                                   # (K1, TB); rows >= S are zero

        w1 = params_ref[0:_HID, 0:k1]                      # (16, K1)
        w2 = params_ref[16:32, 0:_HID]                     # (16, 16)
        w3 = params_ref[32:48, 0:_HID]                     # (16, 16); rows 2..15 zero
        b1 = params_ref[48:64, 0:1]                        # (16, 1) -> lane-broadcast
        b2 = params_ref[48:64, 1:2]
        b3 = params_ref[48:64, 2:3]

        h = jnp.maximum(jnp.dot(w1, xt, preferred_element_type=jnp.float32) + b1, 0.0)
        h = jnp.maximum(jnp.dot(w2, h, preferred_element_type=jnp.float32) + b2, 0.0)
        logits = jnp.dot(w3, h, preferred_element_type=jnp.float32) + b3   # (16, TB)

        # ---- Normal(mu, sigma) head, all in lane-dense (1, TB) rows ----------
        mu = jax.nn.sigmoid(logits[0:1, :]) * 2.0 - 1.0    # probs[., 0] * 2 - 1
        sig = jax.nn.sigmoid(logits[1:2, :])               # probs[., 1]
        eps = eps_ref[...]                                 # (1, TB) ~ N(0, 1)
        act = mu + sig * eps                               # dist.sample()

        log_sig = jnp.log(sig)                             # shared by log_prob & entropy
        # z = (act - mu) / sig == eps exactly -> no reciprocal, no 0*inf hazard.
        logp = -0.5 * (eps * eps) - log_sig - half_log_2pi  # Normal.log_prob(act)
        ent = 0.5 + half_log_2pi + log_sig                  # Normal.entropy()

        # ---- slim writeback: rows 0..2 = act / logp / ent, rows 3..7 zero ----
        tb = act.shape[-1]
        out_ref[3:_OUT_ROWS, :] = jnp.zeros((_OUT_ROWS - 3, tb), jnp.float32)
        out_ref[0:1, :] = act
        out_ref[1:2, :] = logp
        out_ref[2:3, :] = ent

    return kernel


def _run_actor(states_t, eps_row, packed, state_dim, tile, parallel):
    """states_t: (K1, n_pad) f32; eps_row: (1, n_pad) f32; n_pad % tile == 0."""
    k1, n_pad = states_t.shape
    grid = (n_pad // tile,)
    kernel = make_actor_kernel(state_dim)
    return pl.pallas_call(
        kernel,
        out_shape=jax.ShapeDtypeStruct((_OUT_ROWS, n_pad), jnp.float32),
        grid_spec=pltpu.PrefetchScalarGridSpec(
            num_scalar_prefetch=0,
            grid=grid,
            in_specs=[
                pl.BlockSpec((k1, tile), lambda i: (0, i)),
                pl.BlockSpec((1, tile), lambda i: (0, i)),
                # Constant block index -> weight slab DMA'd once, VMEM-resident.
                pl.BlockSpec(packed.shape, lambda i: (0, 0)),
            ],
            out_specs=pl.BlockSpec((_OUT_ROWS, tile), lambda i: (0, i)),
        ),
        compiler_params=pltpu.CompilerParams(
            dimension_semantics=(("parallel",) if parallel else ("arbitrary",)),
        ),
    )(states_t, eps_row, packed)


def _actor_pallas(states, eps_rows, packed, tile, parallel):
    """Pad (N,S) states / (N,) noises to the transposed, tile-aligned layout and run."""
    n, s = states.shape
    k1 = _k1(s)
    n_pad = _round_up(n, tile)
    xt = jnp.pad(states.astype(jnp.float32),
                 ((0, n_pad - n), (0, k1 - s))).T                # (K1, n_pad)
    eps = jnp.pad(eps_rows.astype(jnp.float32),
                  (0, n_pad - n)).reshape(1, n_pad)              # (1, n_pad)
    return _run_actor(xt, eps, packed, s, tile, parallel)


def _choose_rollout_tile(n, max_tile=2048, num_cores=2):
    # As few grid steps as possible (~0.35us overhead each), step count a
    # multiple of the v7x TensorCore count, tiles a multiple of 128 lanes
    # (lane-dense unmasked stores). max_tile=2048 keeps the double-buffered
    # working set tiny relative to every generation's VMEM budget.
    num_tiles = _round_up(max(num_cores, -(-n // max_tile)), num_cores)
    return int(min(max_tile, _round_up(-(-n // num_tiles), 128)))


@jax.jit
def actor_forward(state, packed_params, noise):
    """Exact PyTorch Actor.forward(state) semantics via the Pallas kernel.

    state: (B, state_dim); noise: scalar N(0,1) draw (dist.sample()'s epsilon).
    Returns (act scalar, act_log_prob (1,), act_entropy scalar); the Normal
    distribution is built from batch row 0 (probs[0][0], probs[0][1]).
    """
    b, _ = state.shape
    eps_rows = jnp.broadcast_to(jnp.asarray(noise, jnp.float32), (b,))
    out = _actor_pallas(state, eps_rows, packed_params, tile=128, parallel=False)
    return out[0, 0], out[1, 0].reshape(1), out[2, 0]


@functools.partial(jax.jit, static_argnames=("max_tile",))
def actor_forward_rollout(states, packed_params, noises, max_tile=2048):
    """N independent Actor forward passes in ONE pallas_call.

    states: (N, state_dim); noises: (N,) standard-normal draws.
    Returns (act (N,), log_prob (N,), entropy (N,)).
    """
    n, _ = states.shape
    tile = _choose_rollout_tile(n, max_tile)
    out = _actor_pallas(states, noises, packed_params, tile=tile, parallel=True)
    return out[0, :n], out[1, :n], out[2, :n]


def init_actor_params(key, state_dim):
    """Deterministic nn.Linear-style init (uniform(-1/sqrt(fan_in), +))."""
    def linear(k, fan_in, fan_out):
        kw, kb = jax.random.split(k)
        bound = 1.0 / math.sqrt(fan_in)
        w = jax.random.uniform(kw, (fan_out, fan_in), jnp.float32, -bound, bound)
        b = jax.random.uniform(kb, (fan_out,), jnp.float32, -bound, bound)
        return w, b

    k1, k2, k3 = jax.random.split(key, 3)
    w1, b1 = linear(k1, state_dim, _HID)
    w2, b2 = linear(k2, _HID, _HID)
    w3, b3 = linear(k3, _HID, 2)
    return (w1, b1, w2, b2, w3, b3)


def actor_reference(state, params, noise):
    """Pure-JAX reference matching the PyTorch module."""
    w1, b1, w2, b2, w3, b3 = params
    hi = jax.lax.Precision.HIGHEST
    h = jnp.maximum(jnp.dot(state, w1.T, precision=hi) + b1, 0.0)
    h = jnp.maximum(jnp.dot(h, w2.T, precision=hi) + b2, 0.0)
    probs = jax.nn.sigmoid(jnp.dot(h, w3.T, precision=hi) + b3)
    mu = probs[0, 0] * 2.0 - 1.0
    sig = probs[0, 1]
    act = mu + sig * noise
    log_sig = jnp.log(sig)
    ent = 0.5 + _HALF_LOG_2PI + log_sig
    logp = -((act - mu) ** 2) / (2.0 * sig * sig) - log_sig - _HALF_LOG_2PI
    return act, jnp.reshape(logp, (1,)), ent


# Review item: for the B <= 8 per-env-step call, a fused XLA version is cheaper
# than any kernel launch; use this one there and keep the Pallas kernel for the
# batched rollout path.
actor_forward_xla = jax.jit(actor_reference)


if __name__ == "__main__":
    key = jax.random.PRNGKey(0)
    k_params, k_state, k_noise, k_rs, k_rn = jax.random.split(key, 5)

    batch, state_dim = 2, 8
    params = init_actor_params(k_params, state_dim)
    packed = pack_actor_params(params)        # one-time packing, outside hot path

    state = jax.random.normal(k_state, (batch, state_dim), jnp.float32)
    noise = jax.random.normal(k_noise, (), jnp.float32)   # standard-normal draw

    act, act_log_prob, act_entropy = actor_forward(state, packed, noise)
    jax.block_until_ready((act, act_log_prob, act_entropy))

    ref_act, ref_logp, ref_ent = actor_reference(state, params, noise)
    assert jnp.allclose(act, ref_act, atol=1e-3, rtol=1e-3)
    assert jnp.allclose(act_log_prob, ref_logp, atol=1e-3, rtol=1e-3)
    assert jnp.allclose(act_entropy, ref_ent, atol=1e-3, rtol=1e-3)

    # Batched rollout: 256 independent states in one pallas_call, gridded into
    # 2 large tiles (v7x megacore split; minimal step overhead elsewhere).
    n_roll = 256
    states = jax.random.normal(k_rs, (n_roll, state_dim), jnp.float32)
    noises = jax.random.normal(k_rn, (n_roll,), jnp.float32)
    acts, logps, ents = actor_forward_rollout(states, packed, noises)
    jax.block_until_ready((acts, logps, ents))

    # Spot-check a few rollout rows against the pure-JAX reference.
    for i in (0, 7, n_roll - 1):
        ra, rlp, re = actor_reference(states[i:i + 1], params, noises[i])
        assert jnp.allclose(acts[i], ra, atol=1e-3, rtol=1e-3)
        assert jnp.allclose(logps[i], rlp[0], atol=1e-3, rtol=1e-3)
        assert jnp.allclose(ents[i], re, atol=1e-3, rtol=1e-3)

    print("KERNEL_OK")
</pallas_src>

<mosaic_0001>
module attributes {stable_mosaic.version = 11 : i64} {
  func.func @kernel(%arg0: i32, %arg1: memref<8x128xf32, #tpu.memory_space<vmem>>, %arg2: memref<1x128xf32, #tpu.memory_space<vmem>>, %arg3: memref<64x16xf32, #tpu.memory_space<vmem>>, %arg4: memref<8x128xf32, #tpu.memory_space<vmem>>) attributes {dimension_semantics = [#tpu.dimension_semantics<arbitrary>], iteration_bounds = array<i64: 1>, scalar_prefetch = 0 : i64, scratch_operands = 0 : i64, tpu.core_type = #tpu.core_type<tc>, window_params = [{transform_indices = @transform_0, window_bounds = array<i64: 8, 128>}, {transform_indices = @transform_1, window_bounds = array<i64: 1, 128>}, {pipeline_mode = #tpu.pipeline_mode<synchronous>, transform_indices = @transform_2, window_bounds = array<i64: 64, 16>}, {transform_indices = @transform_3, window_bounds = array<i64: 8, 128>}]} {
    %c0 = arith.constant 0 : index
    %c0_0 = arith.constant 0 : index
    %0 = vector.load %arg1[%c0, %c0_0] : memref<8x128xf32, #tpu.memory_space<vmem>>, vector<8x128xf32>
    %c0_1 = arith.constant 0 : index
    %c0_2 = arith.constant 0 : index
    %1 = vector.load %arg3[%c0_1, %c0_2] : memref<64x16xf32, #tpu.memory_space<vmem>>, vector<16x8xf32>
    %c16 = arith.constant 16 : index
    %c0_3 = arith.constant 0 : index
    %2 = vector.load %arg3[%c16, %c0_3] : memref<64x16xf32, #tpu.memory_space<vmem>>, vector<16x16xf32>
    %c32 = arith.constant 32 : index
    %c0_4 = arith.constant 0 : index
    %3 = vector.load %arg3[%c32, %c0_4] : memref<64x16xf32, #tpu.memory_space<vmem>>, vector<16x16xf32>
    %c48 = arith.constant 48 : index
    %c0_5 = arith.constant 0 : index
    %4 = vector.load %arg3[%c48, %c0_5] : memref<64x16xf32, #tpu.memory_space<vmem>>, vector<16x1xf32>
    %c48_6 = arith.constant 48 : index
    %c1 = arith.constant 1 : index
    %5 = vector.load %arg3[%c48_6, %c1] : memref<64x16xf32, #tpu.memory_space<vmem>>, vector<16x1xf32>
    %c48_7 = arith.constant 48 : index
    %c2 = arith.constant 2 : index
    %6 = vector.load %arg3[%c48_7, %c2] : memref<64x16xf32, #tpu.memory_space<vmem>>, vector<16x1xf32>
    %cst = arith.constant dense<0.000000e+00> : vector<16x128xf32>
    %7 = tpu.matmul %1, %0, %cst {dimension_numbers = #tpu.dot_dimension_numbers<[1], [0], [0], [1], [0, 0, 1, 1], [], []>} : vector<16x8xf32>, vector<8x128xf32>, vector<16x128xf32> -> vector<16x128xf32>
    %8 = vector.broadcast %4 : vector<16x1xf32> to vector<16x128xf32>
    %9 = arith.addf %7, %8 : vector<16x128xf32>
    %cst_8 = arith.constant 0.000000e+00 : f32
    %10 = vector.broadcast %cst_8 : f32 to vector<16x128xf32>
    %11 = arith.maximumf %9, %10 : vector<16x128xf32>
    %cst_9 = arith.constant dense<0.000000e+00> : vector<16x128xf32>
    %12 = tpu.matmul %2, %11, %cst_9 {dimension_numbers = #tpu.dot_dimension_numbers<[1], [0], [0], [1], [0, 0, 1, 1], [], []>} : vector<16x16xf32>, vector<16x128xf32>, vector<16x128xf32> -> vector<16x128xf32>
    %13 = vector.broadcast %5 : vector<16x1xf32> to vector<16x128xf32>
    %14 = arith.addf %12, %13 : vector<16x128xf32>
    %cst_10 = arith.constant 0.000000e+00 : f32
    %15 = vector.broadcast %cst_10 : f32 to vector<16x128xf32>
    %16 = arith.maximumf %14, %15 : vector<16x128xf32>
    %cst_11 = arith.constant dense<0.000000e+00> : vector<16x128xf32>
    %17 = tpu.matmul %3, %16, %cst_11 {dimension_numbers = #tpu.dot_dimension_numbers<[1], [0], [0], [1], [0, 0, 1, 1], [], []>} : vector<16x16xf32>, vector<16x128xf32>, vector<16x128xf32> -> vector<16x128xf32>
    %18 = vector.broadcast %6 : vector<16x1xf32> to vector<16x128xf32>
    %19 = arith.addf %17, %18 : vector<16x128xf32>
    %20 = vector.extract_strided_slice %19 {offsets = [0, 0], sizes = [1, 128], strides = [1, 1]} : vector<16x128xf32> to vector<1x128xf32>
    %21 = arith.negf %20 : vector<1x128xf32>
    %22 = math.exp %21 : vector<1x128xf32>
    %cst_12 = arith.constant 1.000000e+00 : f32
    %23 = vector.broadcast %cst_12 : f32 to vector<1x128xf32>
    %24 = arith.addf %23, %22 : vector<1x128xf32>
    %25 = arith.divf %23, %24 : vector<1x128xf32>
    %cst_13 = arith.constant 2.000000e+00 : f32
    %26 = vector.broadcast %cst_13 : f32 to vector<1x128xf32>
    %27 = arith.mulf %25, %26 : vector<1x128xf32>
    %cst_14 = arith.constant 1.000000e+00 : f32
    %28 = vector.broadcast %cst_14 : f32 to vector<1x128xf32>
    %29 = arith.subf %27, %28 : vector<1x128xf32>
    %30 = vector.extract_strided_slice %19 {offsets = [1, 0], sizes = [1, 128], strides = [1, 1]} : vector<16x128xf32> to vector<1x128xf32>
    %31 = arith.negf %30 : vector<1x128xf32>
    %32 = math.exp %31 : vector<1x128xf32>
    %cst_15 = arith.constant 1.000000e+00 : f32
    %33 = vector.broadcast %cst_15 : f32 to vector<1x128xf32>
    %34 = arith.addf %33, %32 : vector<1x128xf32>
    %35 = arith.divf %33, %34 : vector<1x128xf32>
    %c0_16 = arith.constant 0 : index
    %c0_17 = arith.constant 0 : index
    %36 = vector.load %arg2[%c0_16, %c0_17] : memref<1x128xf32, #tpu.memory_space<vmem>>, vector<1x128xf32>
    %37 = arith.mulf %35, %36 : vector<1x128xf32>
    %38 = arith.addf %29, %37 : vector<1x128xf32>
    %39 = math.log %35 : vector<1x128xf32>
    %40 = arith.mulf %36, %36 : vector<1x128xf32>
    %cst_18 = arith.constant -5.000000e-01 : f32
    %41 = vector.broadcast %cst_18 : f32 to vector<1x128xf32>
    %42 = arith.mulf %41, %40 : vector<1x128xf32>
    %43 = arith.subf %42, %39 : vector<1x128xf32>
    %cst_19 = arith.constant 0.918938517 : f32
    %44 = vector.broadcast %cst_19 : f32 to vector<1x128xf32>
    %45 = arith.subf %43, %44 : vector<1x128xf32>
    %cst_20 = arith.constant 1.41893852 : f32
    %46 = vector.broadcast %cst_20 : f32 to vector<1x128xf32>
    %47 = arith.addf %46, %39 : vector<1x128xf32>
    %cst_21 = arith.constant 0.000000e+00 : f32
    %48 = vector.broadcast %cst_21 : f32 to vector<5x128xf32>
    %c3 = arith.constant 3 : index
    %c0_22 = arith.constant 0 : index
    %49 = vector.load %arg4[%c3, %c0_22] : memref<8x128xf32, #tpu.memory_space<vmem>>, vector<5x128xf32>
    tpu.vector_store %arg4[%c3, %c0_22], %48 {strides = array<i32>} : memref<8x128xf32, #tpu.memory_space<vmem>>, vector<5x128xf32>,
    %c0_23 = arith.constant 0 : index
    %c0_24 = arith.constant 0 : index
    %50 = vector.load %arg4[%c0_23, %c0_24] : memref<8x128xf32, #tpu.memory_space<vmem>>, vector<1x128xf32>
    tpu.vector_store %arg4[%c0_23, %c0_24], %38 {strides = array<i32>} : memref<8x128xf32, #tpu.memory_space<vmem>>, vector<1x128xf32>,
    %c1_25 = arith.constant 1 : index
    %c0_26 = arith.constant 0 : index
    %51 = vector.load %arg4[%c1_25, %c0_26] : memref<8x128xf32, #tpu.memory_space<vmem>>, vector<1x128xf32>
    tpu.vector_store %arg4[%c1_25, %c0_26], %45 {strides = array<i32>} : memref<8x128xf32, #tpu.memory_space<vmem>>, vector<1x128xf32>,
    %c2_27 = arith.constant 2 : index
    %c0_28 = arith.constant 0 : index
    %52 = vector.load %arg4[%c2_27, %c0_28] : memref<8x128xf32, #tpu.memory_space<vmem>>, vector<1x128xf32>
    tpu.vector_store %arg4[%c2_27, %c0_28], %47 {strides = array<i32>} : memref<8x128xf32, #tpu.memory_space<vmem>>, vector<1x128xf32>,
    return
  }
  func.func @transform_0(%arg0: i32) -> (i32, i32) {
    %c0_i32 = arith.constant 0 : i32
    %c0_i32_0 = arith.constant 0 : i32
    return %c0_i32, %arg0 : i32, i32
  }
  func.func @transform_1(%arg0: i32) -> (i32, i32) {
    %c0_i32 = arith.constant 0 : i32
    %c0_i32_0 = arith.constant 0 : i32
    return %c0_i32, %arg0 : i32, i32
  }
  func.func @transform_2(%arg0: i32) -> (i32, i32) {
    %c0_i32 = arith.constant 0 : i32
    %c0_i32_0 = arith.constant 0 : i32
    %c0_i32_1 = arith.constant 0 : i32
    return %c0_i32, %c0_i32_0 : i32, i32
  }
  func.func @transform_3(%arg0: i32) -> (i32, i32) {
    %c0_i32 = arith.constant 0 : i32
    %c0_i32_0 = arith.constant 0 : i32
    return %c0_i32, %arg0 : i32, i32
  }
}

</mosaic_0001>

<llo_original>
// kernel: actor_forward.1
$region0: #{actor_forward.1}
  #allocation0 [shape = 'u32[]', space=smem, size = 0x4, offset = 0x4, fixed_abs, tag = 'smem constant byte address 0x4 - core index']
  #allocation1 [shape = 'u32[72,128]{1,0:T(1,128)}', space=vmem, size = 0x9000, scoped, tag = 'internal scratch']
  %s0 = inlined_call_operand.vmem [shape: f32[8,128], index: 0, kind: input, shape index: {}]
  %s1 = inlined_call_operand.vmem [shape: f32[1,128], index: 1, kind: input, shape index: {}]
  %s2 = inlined_call_operand.vmem [shape: f32[64,16], index: 2, kind: input, shape index: {}]
  %s3 = inlined_call_operand.vmem [shape: f32[8,128], index: 3, kind: output, shape index: {}]
  %s4 = sld [smem:[#allocation0]]
  $region22: #{actor_forward.1} parent=0
    _
  %s6 = ssub.s32 1, %s4
  %s7 = scalar_select 0, %s6, %s4
  // Predicated region
  $region2: #{actor_forward.1} parent=0 // pred_check
    _
  $region3: #{actor_forward.1} parent=0 // pred_check_branch
    %9 = sbr.rel (0) target = $region5
  $region4: #{actor_forward.1} parent=0 // pred_region
    _
  $region5: #{actor_forward.1} parent=0 // pred_fallthru
    _
  // Predicated region
  $region6: #{actor_forward.1} parent=0 // pred_check
    _
  $region7: #{actor_forward.1} parent=0 // pred_check_branch
    %11 = sbr.rel (0) target = $region9
  $region8: #{actor_forward.1} parent=0 // pred_region
    _
  $region9: #{actor_forward.1} parent=0 // pred_fallthru
    _
  // Predicated region
  $region10: #{actor_forward.1} parent=0 // pred_check
    _
  $region11: #{actor_forward.1} parent=0 // pred_check_branch
    %13 = sbr.rel (0) target = $region13
  $region12: #{actor_forward.1} parent=0 // pred_region
    _
  $region13: #{actor_forward.1} parent=0 // pred_fallthru
    _
  %v14 = vld [vmem:[%s0] sm:$0xff]
  %v15 = vld [vmem:[%s2] sm:$0xff]
  %v16 = vld [vmem:[%s2 + $0x8] sm:$0xff]
  %v17 = vld [vmem:[%s2 + $0x10] sm:$0xff]
  %v18 = vld [vmem:[%s2 + $0x18] sm:$0xff]
  %v19 = vld [vmem:[%s2 + $0x20] sm:$0xff]
  %v20 = vld [vmem:[%s2 + $0x28] sm:$0xff]
  %v21 = vld [vmem:[%s2 + $0x30] sm:$0xff]
  %v22 = vld [vmem:[%s2 + $0x38] sm:$0xff]
  %24 = vset.pattern.permute.xlu0 0
  %25 = vperm.xlu0 %24, %v21
  %v26 = vpop.permute.xlu0 %25
  %29 = vset.pattern.permute.xlu0 0
  %30 = vperm.xlu0 %29, %v22
  %v31 = vpop.permute.xlu0 %30
  %vm33 = vcmask 64512
  %v35 = vsel %vm33, %v15, 0
  %v38 = vsel %vm33, %v16, 0
  %40 = vmatpush.msra.mxu0 0.0
  %41 = vmatpush.msra.mxu0 0.0
  %42 = vmatpush.msra.mxu0 0.0
  %43 = vmatpush.msra.mxu0 0.0
  %44 = vmatpush.msra.mxu0 0.0
  %45 = vmatpush.msra.mxu0 0.0
  %46 = vmatpush.msra.mxu0 0.0
  %47 = vmatpush.msra.mxu0 0.0
  %48 = vmatpush.msra.mxu0 0.0
  %49 = vmatpush.msra.mxu0 0.0
  %50 = vmatpush.msra.mxu0 0.0
  %51 = vmatpush.msra.mxu0 0.0
  %52 = vmatpush.msra.mxu0 0.0
  %53 = vmatpush.msra.mxu0 0.0
  %54 = vmatpush.msra.mxu0 0.0
  %55 = vmatpush.msra.mxu0 %v14
  %56 = vmatmul.f32.gmra.mxu0 %v35
  %v57 = vpop.f32.mrf.mxu0
  %v58 = vadd.f32 %v26, %v57
  %59 = vmatmul.f32.gmra.mxu0 %v38
  %v60 = vpop.f32.mrf.mxu0
  %v61 = vadd.f32 %v31, %v60
  %62 = vdwg.mxu0
  %v63 = vmax.f32 %v58, 0.0
  %v64 = vmax.f32 %v61, 0.0
  %65 = vset.pattern.permute.xlu0 1
  %66 = vperm.xlu0 %65, %v21
  %v67 = vpop.permute.xlu0 %66
  %69 = vset.pattern.permute.xlu0 1
  %70 = vperm.xlu0 %69, %v22
  %v71 = vpop.permute.xlu0 %70
  %vm73 = vcmask 130048
  %v75 = vsel %vm73, %v17, 0
  %v78 = vsel %vm73, %v18, 0
  %80 = vmatpush.msra.mxu0 0.0
  %81 = vmatpush.msra.mxu0 0.0
  %82 = vmatpush.msra.mxu0 0.0
  %83 = vmatpush.msra.mxu0 0.0
  %84 = vmatpush.msra.mxu0 0.0
  %85 = vmatpush.msra.mxu0 0.0
  %86 = vmatpush.msra.mxu0 0.0
  %87 = vmatpush.msra.mxu0 0.0
  %88 = vmatpush.msra.mxu0 0.0
  %89 = vmatpush.msra.mxu0 0.0
  %90 = vmatpush.msra.mxu0 0.0
  %91 = vmatpush.msra.mxu0 0.0
  %92 = vmatpush.msra.mxu0 0.0
  %93 = vmatpush.msra.mxu0 0.0
  %94 = vmatpush.msra.mxu0 %v64
  %95 = vmatpush.msra.mxu0 %v63
  %96 = vmatmul.f32.gmra.mxu0 %v75
  %v97 = vpop.f32.mrf.mxu0
  %v98 = vadd.f32 %v67, %v97
  %99 = vmatmul.f32.gmra.mxu0 %v78
  %v100 = vpop.f32.mrf.mxu0
  %v101 = vadd.f32 %v71, %v100
  %102 = vdwg.mxu0
  %v103 = vmax.f32 %v98, 0.0
  %v104 = vmax.f32 %v101, 0.0
  %105 = vset.pattern.permute.xlu0 2
  %106 = vperm.xlu0 %105, %v21
  %v107 = vpop.permute.xlu0 %106
  %109 = vset.pattern.permute.xlu0 2
  %110 = vperm.xlu0 %109, %v22
  %v111 = vpop.permute.xlu0 %110
  %v113 = vsel %vm73, %v19, 0
  %v116 = vsel %vm73, %v20, 0
  %118 = vmatpush.msra.mxu0 0.0
  %119 = vmatpush.msra.mxu0 0.0
  %120 = vmatpush.msra.mxu0 0.0
  %121 = vmatpush.msra.mxu0 0.0
  %122 = vmatpush.msra.mxu0 0.0
  %123 = vmatpush.msra.mxu0 0.0
  %124 = vmatpush.msra.mxu0 0.0
  %125 = vmatpush.msra.mxu0 0.0
  %126 = vmatpush.msra.mxu0 0.0
  %127 = vmatpush.msra.mxu0 0.0
  %128 = vmatpush.msra.mxu0 0.0
  %129 = vmatpush.msra.mxu0 0.0
  %130 = vmatpush.msra.mxu0 0.0
  %131 = vmatpush.msra.mxu0 0.0
  %132 = vmatpush.msra.mxu0 %v104
  %133 = vmatpush.msra.mxu0 %v103
  %134 = vmatmul.f32.gmra.mxu0 %v113
  %v135 = vpop.f32.mrf.mxu0
  %v136 = vadd.f32 %v107, %v135
  %137 = vmatmul.f32.gmra.mxu0 %v116
  %v138 = vpop.f32.mrf.mxu0
  %139 = vdwg.mxu0
  %v140 = vxor.u32 %v136, 2147483648
  %v141 = vmul.f32 %v140, 1.442695
  %v142 = vpow.pop %v141
  %v143 = vadd.f32 %v142, 1.0
  %v144 = vrcp.pop %v143
  %v145 = vmul.f32 %v143, %v144
  %v146 = vsub.f32 1.0, %v145
  %v147 = vmul.f32 %v144, %v146
  %v148 = vadd.f32 %v144, %v147
  %vm149 = vweird.f32 %v143
  %vm150 = vweird.f32 %v144
  %vm151 = vmor %vm149, %vm150
  %v152 = vsel %vm151, %v144, %v148
  %v153 = vand.u32 2147483647, %v143
  %vm154 = vcmp.eq.f32.partialorder %v153, 8.507059e+37
  %v155 = vand.u32 %v143, 2147483648
  %v156 = vor.u32 1.1754944e-38, %v155
  %v157 = vsel %vm154, %v156, %v152
  %v158 = vmul.f32 1.0, %v157
  %v159 = vmul.f32 %v158, 2.0
  %v160 = vsub.f32 %v159, 1.0
  %v161 = vld [vmem:[%s1] sm:$0x1]
  %v163 = vperm.slane %v161, 0
  %v165 = vmul.f32 %v158, %v163
  %v167 = vrot.slane %v165, 1
  %v169 = vadd.f32 %v160, %v167
  %v170 = vlog2.pop %v158
  %v171 = vmul.f32 %v170, 0.6931472
  %v172 = vmul.f32 %v161, %v161
  %v173 = vmul.f32 %v172, -0.5
  %175 = vst [vmem:[#allocation1] sm:$0xff] %v171
  %s176 = scalar_lea.vmem [#allocation1], 1
  %v177 = vld [vmem:[%s176] ss:$9 sm:$0xff]
  %v179 = vsub.f32 %v173, %v177
  %v180 = vsub.f32 %v179, 0.9189385
  %v181 = vadd.f32 %v171, 1.4189385
  %182 = vst [vmem:[%s3 + $0x3] sm:$0x1f] 0.0
  %183 = vst [vmem:[%s3] sm:$0x1] %v169
  %184 = vst [vmem:[%s3 + $0x1] sm:$0x1] %v180
  %185 = vst [vmem:[%s3 + $0x1] sm:$0x2] %v181
  // Predicated region
  $region14: #{actor_forward.1} parent=0 // pred_check
    _
  $region15: #{actor_forward.1} parent=0 // pred_check_branch
    %187 = sbr.rel (0) target = $region17
  $region16: #{actor_forward.1} parent=0 // pred_region
    _
  $region17: #{actor_forward.1} parent=0 // pred_fallthru
    _
  // Predicated region
  $region18: #{actor_forward.1} parent=0 // pred_check
    _
  $region19: #{actor_forward.1} parent=0 // pred_check_branch
    %189 = sbr.rel (0) target = $region21
  $region20: #{actor_forward.1} parent=0 // pred_region
    _
  $region21: #{actor_forward.1} parent=0 // pred_fallthru
    _

</llo_original>
